<compile_context>
chip_gen: v7x
topology: tpu7x:2x2x1
jax: 0.10.0
libtpu: 0.0.40
codegen_flags: <defaults>
</compile_context>

<pallas_src>
import jax
import jax.numpy as jnp
import numpy as np
from jax.experimental import pallas as pl
from jax.experimental.pallas import tpu as pltpu

EPS = 1e-5


def _block_kernel(x_ref, wb1_ref, wb2_ref, g1_ref, b1_ref, g2_ref, b2_ref,
                  cavg_ref, out_ref, pad_ref):
    # x_ref   : (N, H, W*C)      unpadded input, NHWC with (W, C) collapsed
    # wb*_ref : (3*W*C, W*C)     banded row-im2col conv weights
    # g*/b*   : (1, W*C)         BN affine params, pre-tiled to the lane layout
    # cavg    : (W*C, W*C)       same-channel averaging / re-broadcast matrix
    # out_ref : (N*H, W*C)       lane-dense output
    # pad_ref : (N, H+2, W*C)    VMEM scratch, reused for both convs
    N, H, WC = x_ref.shape
    NH = N * H

    # ---- zero ONLY the 1-row halo (W-padding lives in the band weights) ----
    pad_ref[:, 0:1, :] = jnp.zeros((N, 1, WC), jnp.float32)
    pad_ref[:, H + 1:H + 2, :] = jnp.zeros((N, 1, WC), jnp.float32)

    def conv3x3(wb_ref):
        # Row-im2col: one lane-aligned concat of the 3 row windows (slices of
        # the scratch ref, never the full tensor), then a single MXU matmul.
        patch = jnp.concatenate(
            [pad_ref[:, kh:kh + H, :] for kh in range(3)], axis=-1)
        return jnp.dot(patch.reshape(NH, 3 * WC), wb_ref[...],
                       preferred_element_type=jnp.float32)

    def batchnorm(z, g_t, b_t):
        # Per-channel batch stats with two-pass (centered) variance.  `cavg`
        # both averages the W replicas of each channel and broadcasts the
        # per-channel stats back to the (w, c) lane layout in one tiny matmul,
        # so all elementwise work stays lane-dense.
        col_sum = jnp.sum(z, axis=0, keepdims=True)                    # (1, WC)
        mean_t = jnp.dot(col_sum, cavg_ref[...],
                         preferred_element_type=jnp.float32)           # (1, WC)
        zc = z - mean_t
        col_sq = jnp.sum(zc * zc, axis=0, keepdims=True)
        var_t = jnp.dot(col_sq, cavg_ref[...],
                        preferred_element_type=jnp.float32)
        scale_t = g_t * jax.lax.rsqrt(var_t + EPS)                     # folded scale
        return zc * scale_t + b_t

    # ---- conv1 -> BN1 -> ReLU ---------------------------------------------
    pad_ref[:, 1:H + 1, :] = x_ref[...]
    y = jnp.maximum(batchnorm(conv3x3(wb1_ref), g1_ref[...], b1_ref[...]), 0.0)

    # ---- conv2 -> BN2 (reuse the same padded scratch; halo is still zero) --
    pad_ref[:, 1:H + 1, :] = y.reshape(N, H, WC)
    z = batchnorm(conv3x3(wb2_ref), g2_ref[...], b2_ref[...])

    # ---- residual add + ReLU, lane-dense store ------------------------------
    out_ref[...] = jnp.maximum(z + x_ref[...].reshape(NH, WC), 0.0)


def _band_weight(w_hwio, W):
    """HWIO (3,3,Cin,Cout) conv weight -> banded row-im2col matrix.

    Returns WB of shape (3*W*Cin, W*Cout) with
        WB[(kh*W + wi)*Cin + ci, wo*Cout + co] = w[kh, wi - wo + 1, ci, co]
    when wi - wo + 1 in {0,1,2}, else 0.  A 3x3 / stride-1 / pad-1 conv of a
    (N, H, W*Cin) activation then becomes a single matmul with the
    row-concatenated padded activation; W-direction zero padding is implicit
    in the band structure, H-direction padding is the 1-row halo.
    """
    KH, KW, Cin, Cout = w_hwio.shape
    # sel[kw, wi, wo] = 1 iff wi == wo + kw - 1   (constant, built in numpy)
    sel = (np.arange(W)[None, :, None]
           == np.arange(W)[None, None, :] + np.arange(KW)[:, None, None] - 1)
    sel = jnp.asarray(sel.astype(np.float32))
    wb = jnp.einsum('hkio,kpw->hpiwo', w_hwio.astype(jnp.float32), sel)
    return wb.reshape(KH * W * Cin, W * Cout)


@jax.jit
def block_forward(x_nchw, w1_hwio, w2_hwio, g1, b1, g2, b2):
    """Fused ResNet Block forward (same_shape=True). Input/output are NCHW."""
    N, C, H, W = x_nchw.shape
    WC = W * C

    # Lane-dense working layout: NHWC with (W, C) collapsed onto the lane axis
    # (W*C == 128 for the demo shape -> fully dense vregs and unmasked stores).
    x = jnp.transpose(x_nchw, (0, 2, 3, 1)).reshape(N, H, WC).astype(jnp.float32)

    wb1 = _band_weight(w1_hwio, W)            # (3*WC, WC)
    wb2 = _band_weight(w2_hwio, W)

    def tile_c(v):                            # (C,) -> (1, W*C), pre-tiled
        return jnp.tile(v.reshape(1, C).astype(jnp.float32), (1, W))

    # cavg[j, k] = 1/(N*H*W) if columns j and k belong to the same channel.
    j = np.arange(WC)
    cavg = jnp.asarray((j[:, None] % C == j[None, :] % C).astype(np.float32)
                       / float(N * H * W))

    nbytes = 4 * (x.size + wb1.size + wb2.size + 4 * WC + WC * WC + N * H * WC)
    vmem_bytes = nbytes + 4 * N * (H + 2) * WC
    cost = pl.CostEstimate(
        flops=int(2 * 2 * N * H * (3 * WC) * WC + 4 * 2 * WC * WC),
        transcendentals=int(2 * WC),
        bytes_accessed=int(nbytes))

    vmem = pl.BlockSpec(memory_space=pltpu.MemorySpace.VMEM)
    out2d = pl.pallas_call(
        _block_kernel,
        out_shape=jax.ShapeDtypeStruct((N * H, WC), jnp.float32),
        in_specs=[vmem] * 8,
        out_specs=vmem,
        scratch_shapes=[pltpu.VMEM((N, H + 2, WC), jnp.float32)],
        compiler_params=pltpu.CompilerParams(
            vmem_limit_bytes=int(min(64 << 20, max(16 << 20, 8 * vmem_bytes)))),
        cost_estimate=cost,
    )(x, wb1, wb2, tile_c(g1), tile_c(b1), tile_c(g2), tile_c(b2), cavg)

    out = out2d.reshape(N, H, W, C)
    return jnp.transpose(out, (0, 3, 1, 2))                  # -> NCHW


def _reference(x_nchw, w1, w2, g1, b1, g2, b2):
    """Pure-JAX reference matching the PyTorch train-mode forward."""
    x = jnp.transpose(x_nchw, (0, 2, 3, 1)).astype(jnp.float32)

    def conv(inp, w):
        return jax.lax.conv_general_dilated(
            inp, w, (1, 1), 'SAME',
            dimension_numbers=('NHWC', 'HWIO', 'NHWC'))

    def bn(y, g, b):
        m = jnp.mean(y, axis=(0, 1, 2), keepdims=True)
        v = jnp.mean((y - m) ** 2, axis=(0, 1, 2), keepdims=True)
        return (y - m) * jax.lax.rsqrt(v + EPS) * g + b

    y = jax.nn.relu(bn(conv(x, w1), g1, b1))
    z = bn(conv(y, w2), g2, b2)
    out = jax.nn.relu(z + x)
    return jnp.transpose(out, (0, 3, 1, 2))


if __name__ == "__main__":
    # Block(in_channel=8, out_channel=8), input (2, 8, 16, 16) NCHW.
    N, C, H, W = 2, 8, 16, 16
    key = jax.random.PRNGKey(0)
    kx, k1, k2, kg1, kb1, kg2, kb2 = jax.random.split(key, 7)

    x = jax.random.normal(kx, (N, C, H, W), jnp.float32)
    w1 = jax.random.normal(k1, (3, 3, C, C), jnp.float32) * 0.2   # HWIO
    w2 = jax.random.normal(k2, (3, 3, C, C), jnp.float32) * 0.2
    g1 = 1.0 + 0.1 * jax.random.normal(kg1, (C,), jnp.float32)
    b1 = 0.1 * jax.random.normal(kb1, (C,), jnp.float32)
    g2 = 1.0 + 0.1 * jax.random.normal(kg2, (C,), jnp.float32)
    b2 = 0.1 * jax.random.normal(kb2, (C,), jnp.float32)

    out = jax.block_until_ready(block_forward(x, w1, w2, g1, b1, g2, b2))
    ref = jax.block_until_ready(_reference(x, w1, w2, g1, b1, g2, b2))
    np.testing.assert_allclose(np.asarray(out), np.asarray(ref),
                               atol=2e-3, rtol=2e-3)
    print("KERNEL_OK")
</pallas_src>

<mosaic_0001>
module attributes {stable_mosaic.version = 11 : i64} {
  func.func @_block_kernel(%arg0: memref<2x16x128xf32, #tpu.memory_space<vmem>>, %arg1: memref<384x128xf32, #tpu.memory_space<vmem>>, %arg2: memref<384x128xf32, #tpu.memory_space<vmem>>, %arg3: memref<1x128xf32, #tpu.memory_space<vmem>>, %arg4: memref<1x128xf32, #tpu.memory_space<vmem>>, %arg5: memref<1x128xf32, #tpu.memory_space<vmem>>, %arg6: memref<1x128xf32, #tpu.memory_space<vmem>>, %arg7: memref<128x128xf32, #tpu.memory_space<vmem>>, %arg8: memref<32x128xf32, #tpu.memory_space<vmem>>, %arg9: memref<2x18x128xf32, #tpu.memory_space<vmem>>) attributes {dimension_semantics = [], scalar_prefetch = 0 : i64, scratch_operands = 1 : i64, tpu.core_type = #tpu.core_type<tc>} {
    %cst = arith.constant 0.000000e+00 : f32
    %0 = vector.broadcast %cst : f32 to vector<2x1x128xf32>
    %c0 = arith.constant 0 : index
    %c0_0 = arith.constant 0 : index
    %c0_1 = arith.constant 0 : index
    %1 = vector.load %arg9[%c0, %c0_0, %c0_1] : memref<2x18x128xf32, #tpu.memory_space<vmem>>, vector<2x1x128xf32>
    tpu.vector_store %arg9[%c0, %c0_0, %c0_1], %0 {strides = array<i32>} : memref<2x18x128xf32, #tpu.memory_space<vmem>>, vector<2x1x128xf32>,
    %cst_2 = arith.constant 0.000000e+00 : f32
    %2 = vector.broadcast %cst_2 : f32 to vector<2x1x128xf32>
    %c0_3 = arith.constant 0 : index
    %c17 = arith.constant 17 : index
    %c0_4 = arith.constant 0 : index
    %3 = vector.load %arg9[%c0_3, %c17, %c0_4] : memref<2x18x128xf32, #tpu.memory_space<vmem>>, vector<2x1x128xf32>
    tpu.vector_store %arg9[%c0_3, %c17, %c0_4], %2 {strides = array<i32>} : memref<2x18x128xf32, #tpu.memory_space<vmem>>, vector<2x1x128xf32>,
    %c0_5 = arith.constant 0 : index
    %c0_6 = arith.constant 0 : index
    %c0_7 = arith.constant 0 : index
    %4 = vector.load %arg0[%c0_5, %c0_6, %c0_7] : memref<2x16x128xf32, #tpu.memory_space<vmem>>, vector<2x16x128xf32>
    %c0_8 = arith.constant 0 : index
    %c1 = arith.constant 1 : index
    %c0_9 = arith.constant 0 : index
    %5 = vector.load %arg9[%c0_8, %c1, %c0_9] : memref<2x18x128xf32, #tpu.memory_space<vmem>>, vector<2x16x128xf32>
    tpu.vector_store %arg9[%c0_8, %c1, %c0_9], %4 {strides = array<i32>} : memref<2x18x128xf32, #tpu.memory_space<vmem>>, vector<2x16x128xf32>,
    %c0_10 = arith.constant 0 : index
    %c0_11 = arith.constant 0 : index
    %c0_12 = arith.constant 0 : index
    %6 = vector.load %arg9[%c0_10, %c0_11, %c0_12] : memref<2x18x128xf32, #tpu.memory_space<vmem>>, vector<2x16x128xf32>
    %c0_13 = arith.constant 0 : index
    %c1_14 = arith.constant 1 : index
    %c0_15 = arith.constant 0 : index
    %7 = vector.load %arg9[%c0_13, %c1_14, %c0_15] : memref<2x18x128xf32, #tpu.memory_space<vmem>>, vector<2x16x128xf32>
    %c0_16 = arith.constant 0 : index
    %c2 = arith.constant 2 : index
    %c0_17 = arith.constant 0 : index
    %8 = vector.load %arg9[%c0_16, %c2, %c0_17] : memref<2x18x128xf32, #tpu.memory_space<vmem>>, vector<2x16x128xf32>
    %9 = tpu.concatenate %6, %7, %8 in 2 : vector<2x16x128xf32>, vector<2x16x128xf32>, vector<2x16x128xf32> -> vector<2x16x384xf32>
    %10 = vector.shape_cast %9 : vector<2x16x384xf32> to vector<32x384xf32>
    %c0_18 = arith.constant 0 : index
    %c0_19 = arith.constant 0 : index
    %11 = vector.load %arg1[%c0_18, %c0_19] : memref<384x128xf32, #tpu.memory_space<vmem>>, vector<384x128xf32>
    %cst_20 = arith.constant dense<0.000000e+00> : vector<32x128xf32>
    %12 = tpu.matmul %10, %11, %cst_20 {dimension_numbers = #tpu.dot_dimension_numbers<[1], [0], [0], [1], [0, 0, 1, 1], [], []>} : vector<32x384xf32>, vector<384x128xf32>, vector<32x128xf32> -> vector<32x128xf32>
    %c0_21 = arith.constant 0 : index
    %c0_22 = arith.constant 0 : index
    %13 = vector.load %arg3[%c0_21, %c0_22] : memref<1x128xf32, #tpu.memory_space<vmem>>, vector<1x128xf32>
    %c0_23 = arith.constant 0 : index
    %c0_24 = arith.constant 0 : index
    %14 = vector.load %arg4[%c0_23, %c0_24] : memref<1x128xf32, #tpu.memory_space<vmem>>, vector<1x128xf32>
    %cst_25 = arith.constant dense<0.000000e+00> : vector<128xf32>
    %15 = vector.multi_reduction <add>, %12, %cst_25 [0] : vector<32x128xf32> to vector<128xf32>
    %16 = vector.shape_cast %15 : vector<128xf32> to vector<1x128xf32>
    %c0_26 = arith.constant 0 : index
    %c0_27 = arith.constant 0 : index
    %17 = vector.load %arg7[%c0_26, %c0_27] : memref<128x128xf32, #tpu.memory_space<vmem>>, vector<128x128xf32>
    %cst_28 = arith.constant dense<0.000000e+00> : vector<1x128xf32>
    %18 = tpu.matmul %16, %17, %cst_28 {dimension_numbers = #tpu.dot_dimension_numbers<[1], [0], [0], [1], [0, 0, 1, 1], [], []>} : vector<1x128xf32>, vector<128x128xf32>, vector<1x128xf32> -> vector<1x128xf32>
    %19 = vector.broadcast %18 : vector<1x128xf32> to vector<32x128xf32>
    %20 = arith.subf %12, %19 : vector<32x128xf32>
    %21 = arith.mulf %20, %20 : vector<32x128xf32>
    %cst_29 = arith.constant dense<0.000000e+00> : vector<128xf32>
    %22 = vector.multi_reduction <add>, %21, %cst_29 [0] : vector<32x128xf32> to vector<128xf32>
    %23 = vector.shape_cast %22 : vector<128xf32> to vector<1x128xf32>
    %c0_30 = arith.constant 0 : index
    %c0_31 = arith.constant 0 : index
    %24 = vector.load %arg7[%c0_30, %c0_31] : memref<128x128xf32, #tpu.memory_space<vmem>>, vector<128x128xf32>
    %cst_32 = arith.constant dense<0.000000e+00> : vector<1x128xf32>
    %25 = tpu.matmul %23, %24, %cst_32 {dimension_numbers = #tpu.dot_dimension_numbers<[1], [0], [0], [1], [0, 0, 1, 1], [], []>} : vector<1x128xf32>, vector<128x128xf32>, vector<1x128xf32> -> vector<1x128xf32>
    %cst_33 = arith.constant 9.99999974E-6 : f32
    %26 = vector.broadcast %cst_33 : f32 to vector<1x128xf32>
    %27 = arith.addf %25, %26 : vector<1x128xf32>
    %28 = math.rsqrt %27 : vector<1x128xf32>
    %29 = arith.mulf %13, %28 : vector<1x128xf32>
    %30 = vector.broadcast %29 : vector<1x128xf32> to vector<32x128xf32>
    %31 = arith.mulf %20, %30 : vector<32x128xf32>
    %32 = vector.broadcast %14 : vector<1x128xf32> to vector<32x128xf32>
    %33 = arith.addf %31, %32 : vector<32x128xf32>
    %cst_34 = arith.constant 0.000000e+00 : f32
    %34 = vector.broadcast %cst_34 : f32 to vector<32x128xf32>
    %35 = arith.maximumf %33, %34 : vector<32x128xf32>
    %36 = vector.shape_cast %35 : vector<32x128xf32> to vector<2x16x128xf32>
    %c0_35 = arith.constant 0 : index
    %c1_36 = arith.constant 1 : index
    %c0_37 = arith.constant 0 : index
    %37 = vector.load %arg9[%c0_35, %c1_36, %c0_37] : memref<2x18x128xf32, #tpu.memory_space<vmem>>, vector<2x16x128xf32>
    tpu.vector_store %arg9[%c0_35, %c1_36, %c0_37], %36 {strides = array<i32>} : memref<2x18x128xf32, #tpu.memory_space<vmem>>, vector<2x16x128xf32>,
    %c0_38 = arith.constant 0 : index
    %c0_39 = arith.constant 0 : index
    %c0_40 = arith.constant 0 : index
    %38 = vector.load %arg9[%c0_38, %c0_39, %c0_40] : memref<2x18x128xf32, #tpu.memory_space<vmem>>, vector<2x16x128xf32>
    %c0_41 = arith.constant 0 : index
    %c1_42 = arith.constant 1 : index
    %c0_43 = arith.constant 0 : index
    %39 = vector.load %arg9[%c0_41, %c1_42, %c0_43] : memref<2x18x128xf32, #tpu.memory_space<vmem>>, vector<2x16x128xf32>
    %c0_44 = arith.constant 0 : index
    %c2_45 = arith.constant 2 : index
    %c0_46 = arith.constant 0 : index
    %40 = vector.load %arg9[%c0_44, %c2_45, %c0_46] : memref<2x18x128xf32, #tpu.memory_space<vmem>>, vector<2x16x128xf32>
    %41 = tpu.concatenate %38, %39, %40 in 2 : vector<2x16x128xf32>, vector<2x16x128xf32>, vector<2x16x128xf32> -> vector<2x16x384xf32>
    %42 = vector.shape_cast %41 : vector<2x16x384xf32> to vector<32x384xf32>
    %c0_47 = arith.constant 0 : index
    %c0_48 = arith.constant 0 : index
    %43 = vector.load %arg2[%c0_47, %c0_48] : memref<384x128xf32, #tpu.memory_space<vmem>>, vector<384x128xf32>
    %cst_49 = arith.constant dense<0.000000e+00> : vector<32x128xf32>
    %44 = tpu.matmul %42, %43, %cst_49 {dimension_numbers = #tpu.dot_dimension_numbers<[1], [0], [0], [1], [0, 0, 1, 1], [], []>} : vector<32x384xf32>, vector<384x128xf32>, vector<32x128xf32> -> vector<32x128xf32>
    %c0_50 = arith.constant 0 : index
    %c0_51 = arith.constant 0 : index
    %45 = vector.load %arg5[%c0_50, %c0_51] : memref<1x128xf32, #tpu.memory_space<vmem>>, vector<1x128xf32>
    %c0_52 = arith.constant 0 : index
    %c0_53 = arith.constant 0 : index
    %46 = vector.load %arg6[%c0_52, %c0_53] : memref<1x128xf32, #tpu.memory_space<vmem>>, vector<1x128xf32>
    %cst_54 = arith.constant dense<0.000000e+00> : vector<128xf32>
    %47 = vector.multi_reduction <add>, %44, %cst_54 [0] : vector<32x128xf32> to vector<128xf32>
    %48 = vector.shape_cast %47 : vector<128xf32> to vector<1x128xf32>
    %c0_55 = arith.constant 0 : index
    %c0_56 = arith.constant 0 : index
    %49 = vector.load %arg7[%c0_55, %c0_56] : memref<128x128xf32, #tpu.memory_space<vmem>>, vector<128x128xf32>
    %cst_57 = arith.constant dense<0.000000e+00> : vector<1x128xf32>
    %50 = tpu.matmul %48, %49, %cst_57 {dimension_numbers = #tpu.dot_dimension_numbers<[1], [0], [0], [1], [0, 0, 1, 1], [], []>} : vector<1x128xf32>, vector<128x128xf32>, vector<1x128xf32> -> vector<1x128xf32>
    %51 = vector.broadcast %50 : vector<1x128xf32> to vector<32x128xf32>
    %52 = arith.subf %44, %51 : vector<32x128xf32>
    %53 = arith.mulf %52, %52 : vector<32x128xf32>
    %cst_58 = arith.constant dense<0.000000e+00> : vector<128xf32>
    %54 = vector.multi_reduction <add>, %53, %cst_58 [0] : vector<32x128xf32> to vector<128xf32>
    %55 = vector.shape_cast %54 : vector<128xf32> to vector<1x128xf32>
    %c0_59 = arith.constant 0 : index
    %c0_60 = arith.constant 0 : index
    %56 = vector.load %arg7[%c0_59, %c0_60] : memref<128x128xf32, #tpu.memory_space<vmem>>, vector<128x128xf32>
    %cst_61 = arith.constant dense<0.000000e+00> : vector<1x128xf32>
    %57 = tpu.matmul %55, %56, %cst_61 {dimension_numbers = #tpu.dot_dimension_numbers<[1], [0], [0], [1], [0, 0, 1, 1], [], []>} : vector<1x128xf32>, vector<128x128xf32>, vector<1x128xf32> -> vector<1x128xf32>
    %cst_62 = arith.constant 9.99999974E-6 : f32
    %58 = vector.broadcast %cst_62 : f32 to vector<1x128xf32>
    %59 = arith.addf %57, %58 : vector<1x128xf32>
    %60 = math.rsqrt %59 : vector<1x128xf32>
    %61 = arith.mulf %45, %60 : vector<1x128xf32>
    %62 = vector.broadcast %61 : vector<1x128xf32> to vector<32x128xf32>
    %63 = arith.mulf %52, %62 : vector<32x128xf32>
    %64 = vector.broadcast %46 : vector<1x128xf32> to vector<32x128xf32>
    %65 = arith.addf %63, %64 : vector<32x128xf32>
    %c0_63 = arith.constant 0 : index
    %c0_64 = arith.constant 0 : index
    %c0_65 = arith.constant 0 : index
    %66 = vector.load %arg0[%c0_63, %c0_64, %c0_65] : memref<2x16x128xf32, #tpu.memory_space<vmem>>, vector<2x16x128xf32>
    %67 = vector.shape_cast %66 : vector<2x16x128xf32> to vector<32x128xf32>
    %68 = arith.addf %65, %67 : vector<32x128xf32>
    %cst_66 = arith.constant 0.000000e+00 : f32
    %69 = vector.broadcast %cst_66 : f32 to vector<32x128xf32>
    %70 = arith.maximumf %68, %69 : vector<32x128xf32>
    %c0_67 = arith.constant 0 : index
    %c0_68 = arith.constant 0 : index
    %71 = vector.load %arg8[%c0_67, %c0_68] : memref<32x128xf32, #tpu.memory_space<vmem>>, vector<32x128xf32>
    tpu.vector_store %arg8[%c0_67, %c0_68], %70 {strides = array<i32>} : memref<32x128xf32, #tpu.memory_space<vmem>>, vector<32x128xf32>,
    return
  }
}

</mosaic_0001>

<llo_original>
// kernel: block_forward.1
$region0: #{block_forward.1}
  #allocation0 [shape = 'u32[]', space=smem, size = 0x4, offset = 0x4, fixed_abs, tag = 'smem constant byte address 0x4 - core index']
  #allocation1 [shape = 'u32[144,128]{1,0:T(1,128)}', space=vmem, size = 0x12000, scoped, tag = 'internal scratch']
  #allocation2 [shape = 'f32[2,18,128]{2,1,0:T(8,128)}', space=vmem, size = 0x6000, scoped, tag = 'scratch operand']
  %s0 = inlined_call_operand.vmem [shape: f32[2,16,128], index: 0, kind: input, shape index: {}]
  %s1 = inlined_call_operand.vmem [shape: f32[384,128], index: 1, kind: input, shape index: {}]
  %s2 = inlined_call_operand.vmem [shape: f32[384,128], index: 2, kind: input, shape index: {}]
  %s3 = inlined_call_operand.vmem [shape: f32[1,128], index: 3, kind: input, shape index: {}]
  %s4 = inlined_call_operand.vmem [shape: f32[1,128], index: 4, kind: input, shape index: {}]
  %s5 = inlined_call_operand.vmem [shape: f32[1,128], index: 5, kind: input, shape index: {}]
  %s6 = inlined_call_operand.vmem [shape: f32[1,128], index: 6, kind: input, shape index: {}]
  %s7 = inlined_call_operand.vmem [shape: f32[128,128], index: 7, kind: input, shape index: {}]
  %s8 = inlined_call_operand.vmem [shape: f32[32,128], index: 8, kind: output, shape index: {}]
  %s9 = sld [smem:[#allocation0]]
  $region42: #{block_forward.1} parent=0
    _
  %s11 = ssub.s32 1, %s9
  %s12 = scalar_select 0, %s11, %s9
  // Predicated region
  $region2: #{block_forward.1} parent=0 // pred_check
    _
  $region3: #{block_forward.1} parent=0 // pred_check_branch
    %14 = sbr.rel (0) target = $region5
  $region4: #{block_forward.1} parent=0 // pred_region
    _
  $region5: #{block_forward.1} parent=0 // pred_fallthru
    _
  // Predicated region
  $region6: #{block_forward.1} parent=0 // pred_check
    _
  $region7: #{block_forward.1} parent=0 // pred_check_branch
    %16 = sbr.rel (0) target = $region9
  $region8: #{block_forward.1} parent=0 // pred_region
    _
  $region9: #{block_forward.1} parent=0 // pred_fallthru
    _
  // Predicated region
  $region10: #{block_forward.1} parent=0 // pred_check
    _
  $region11: #{block_forward.1} parent=0 // pred_check_branch
    %18 = sbr.rel (0) target = $region13
  $region12: #{block_forward.1} parent=0 // pred_region
    _
  $region13: #{block_forward.1} parent=0 // pred_fallthru
    _
  // Predicated region
  $region14: #{block_forward.1} parent=0 // pred_check
    _
  $region15: #{block_forward.1} parent=0 // pred_check_branch
    %20 = sbr.rel (0) target = $region17
  $region16: #{block_forward.1} parent=0 // pred_region
    _
  $region17: #{block_forward.1} parent=0 // pred_fallthru
    _
  // Predicated region
  $region18: #{block_forward.1} parent=0 // pred_check
    _
  $region19: #{block_forward.1} parent=0 // pred_check_branch
    %22 = sbr.rel (0) target = $region21
  $region20: #{block_forward.1} parent=0 // pred_region
    _
  $region21: #{block_forward.1} parent=0 // pred_fallthru
    _
  // Predicated region
  $region22: #{block_forward.1} parent=0 // pred_check
    _
  $region23: #{block_forward.1} parent=0 // pred_check_branch
    %24 = sbr.rel (0) target = $region25
  $region24: #{block_forward.1} parent=0 // pred_region
    _
  $region25: #{block_forward.1} parent=0 // pred_fallthru
    _
  // Predicated region
  $region26: #{block_forward.1} parent=0 // pred_check
    _
  $region27: #{block_forward.1} parent=0 // pred_check_branch
    %26 = sbr.rel (0) target = $region29
  $region28: #{block_forward.1} parent=0 // pred_region
    _
  $region29: #{block_forward.1} parent=0 // pred_fallthru
    _
  // Predicated region
  $region30: #{block_forward.1} parent=0 // pred_check
    _
  $region31: #{block_forward.1} parent=0 // pred_check_branch
    %28 = sbr.rel (0) target = $region33
  $region32: #{block_forward.1} parent=0 // pred_region
    _
  $region33: #{block_forward.1} parent=0 // pred_fallthru
    _
  %29 = vst [vmem:[#allocation2] sm:$0x1] 0.0
  %30 = vst [vmem:[#allocation2 + $0x18] sm:$0x1] 0.0
  %31 = vst [vmem:[#allocation2 + $0x11] sm:$0x1] 0.0
  %32 = vst [vmem:[#allocation2 + $0x29] sm:$0x1] 0.0
  %v33 = vld [vmem:[%s0] sm:$0xff]
  %v34 = vld [vmem:[%s0 + $0x8] sm:$0xff]
  %v35 = vld [vmem:[%s0 + $0x10] sm:$0xff]
  %v36 = vld [vmem:[%s0 + $0x18] sm:$0xff]
  %37 = vst [vmem:[#allocation2 + $0x1] sm:$0xff] %v33
  %38 = vst [vmem:[#allocation2 + $0x9] sm:$0xff] %v34
  %39 = vst [vmem:[#allocation2 + $0x19] sm:$0xff] %v35
  %40 = vst [vmem:[#allocation2 + $0x21] sm:$0xff] %v36
  %v41 = vld [vmem:[#allocation2] sm:$0xff]
  %v42 = vld [vmem:[#allocation2 + $0x8] sm:$0xff]
  %v43 = vld [vmem:[#allocation2 + $0x18] sm:$0xff]
  %v44 = vld [vmem:[#allocation2 + $0x20] sm:$0xff]
  %v45 = vld [vmem:[#allocation2 + $0x1] sm:$0xff]
  %v46 = vld [vmem:[#allocation2 + $0x9] sm:$0xff]
  %v47 = vld [vmem:[#allocation2 + $0x19] sm:$0xff]
  %v48 = vld [vmem:[#allocation2 + $0x21] sm:$0xff]
  %v49 = vld [vmem:[#allocation2 + $0x2] sm:$0xff]
  %v50 = vld [vmem:[#allocation2 + $0xa] sm:$0xff]
  %v51 = vld [vmem:[#allocation2 + $0x1a] sm:$0xff]
  %v52 = vld [vmem:[#allocation2 + $0x22] sm:$0xff]
  %v53 = vld [vmem:[%s1] sm:$0xff]
  %v54 = vld [vmem:[%s1 + $0x8] sm:$0xff]
  %v55 = vld [vmem:[%s1 + $0x10] sm:$0xff]
  %v56 = vld [vmem:[%s1 + $0x18] sm:$0xff]
  %v57 = vld [vmem:[%s1 + $0x20] sm:$0xff]
  %v58 = vld [vmem:[%s1 + $0x28] sm:$0xff]
  %v59 = vld [vmem:[%s1 + $0x30] sm:$0xff]
  %v60 = vld [vmem:[%s1 + $0x38] sm:$0xff]
  %v61 = vld [vmem:[%s1 + $0x40] sm:$0xff]
  %v62 = vld [vmem:[%s1 + $0x48] sm:$0xff]
  %v63 = vld [vmem:[%s1 + $0x50] sm:$0xff]
  %v64 = vld [vmem:[%s1 + $0x58] sm:$0xff]
  %v65 = vld [vmem:[%s1 + $0x60] sm:$0xff]
  %v66 = vld [vmem:[%s1 + $0x68] sm:$0xff]
  %v67 = vld [vmem:[%s1 + $0x70] sm:$0xff]
  %v68 = vld [vmem:[%s1 + $0x78] sm:$0xff]
  %v69 = vld [vmem:[%s1 + $0x80] sm:$0xff]
  %v70 = vld [vmem:[%s1 + $0x88] sm:$0xff]
  %v71 = vld [vmem:[%s1 + $0x90] sm:$0xff]
  %v72 = vld [vmem:[%s1 + $0x98] sm:$0xff]
  %v73 = vld [vmem:[%s1 + $0xa0] sm:$0xff]
  %v74 = vld [vmem:[%s1 + $0xa8] sm:$0xff]
  %v75 = vld [vmem:[%s1 + $0xb0] sm:$0xff]
  %v76 = vld [vmem:[%s1 + $0xb8] sm:$0xff]
  %v77 = vld [vmem:[%s1 + $0xc0] sm:$0xff]
  %v78 = vld [vmem:[%s1 + $0xc8] sm:$0xff]
  %v79 = vld [vmem:[%s1 + $0xd0] sm:$0xff]
  %v80 = vld [vmem:[%s1 + $0xd8] sm:$0xff]
  %v81 = vld [vmem:[%s1 + $0xe0] sm:$0xff]
  %v82 = vld [vmem:[%s1 + $0xe8] sm:$0xff]
  %v83 = vld [vmem:[%s1 + $0xf0] sm:$0xff]
  %v84 = vld [vmem:[%s1 + $0xf8] sm:$0xff]
  %v85 = vld [vmem:[%s1 + $0x100] sm:$0xff]
  %v86 = vld [vmem:[%s1 + $0x108] sm:$0xff]
  %v87 = vld [vmem:[%s1 + $0x110] sm:$0xff]
  %v88 = vld [vmem:[%s1 + $0x118] sm:$0xff]
  %v89 = vld [vmem:[%s1 + $0x120] sm:$0xff]
  %v90 = vld [vmem:[%s1 + $0x128] sm:$0xff]
  %v91 = vld [vmem:[%s1 + $0x130] sm:$0xff]
  %v92 = vld [vmem:[%s1 + $0x138] sm:$0xff]
  %v93 = vld [vmem:[%s1 + $0x140] sm:$0xff]
  %v94 = vld [vmem:[%s1 + $0x148] sm:$0xff]
  %v95 = vld [vmem:[%s1 + $0x150] sm:$0xff]
  %v96 = vld [vmem:[%s1 + $0x158] sm:$0xff]
  %v97 = vld [vmem:[%s1 + $0x160] sm:$0xff]
  %v98 = vld [vmem:[%s1 + $0x168] sm:$0xff]
  %v99 = vld [vmem:[%s1 + $0x170] sm:$0xff]
  %v100 = vld [vmem:[%s1 + $0x178] sm:$0xff]
  %101 = vmatprep.subr.mxu0 0.0
  %102 = vmatpush1.msra.mxu0 %v53
  %103 = vmatprep.subr.mxu0 0.0
  %104 = vmatpush1.msra.mxu0 %v54
  %105 = vmatprep.subr.mxu0 0.0
  %106 = vmatpush1.msra.mxu0 %v55
  %107 = vmatprep.subr.mxu0 0.0
  %108 = vmatpush1.msra.mxu0 %v56
  %109 = vmatprep.subr.mxu0 0.0
  %110 = vmatpush1.msra.mxu0 %v57
  %111 = vmatprep.subr.mxu0 0.0
  %112 = vmatpush1.msra.mxu0 %v58
  %113 = vmatprep.subr.mxu0 0.0
  %114 = vmatpush1.msra.mxu0 %v59
  %115 = vmatprep.subr.mxu0 0.0
  %116 = vmatpush1.msra.mxu0 %v60
  %117 = vmatprep.subr.mxu0 0.0
  %118 = vmatpush1.msra.mxu0 %v61
  %119 = vmatprep.subr.mxu0 0.0
  %120 = vmatpush1.msra.mxu0 %v62
  %121 = vmatprep.subr.mxu0 0.0
  %122 = vmatpush1.msra.mxu0 %v63
  %123 = vmatprep.subr.mxu0 0.0
  %124 = vmatpush1.msra.mxu0 %v64
  %125 = vmatprep.subr.mxu0 0.0
  %126 = vmatpush1.msra.mxu0 %v65
  %127 = vmatprep.subr.mxu0 0.0
  %128 = vmatpush1.msra.mxu0 %v66
  %129 = vmatprep.subr.mxu0 0.0
  %130 = vmatpush1.msra.mxu0 %v67
  %131 = vmatprep.subr.mxu0 0.0
  %132 = vmatpush1.msra.mxu0 %v68
  %133 = vmatprep.subr.mxu0 0.0
  %134 = vmatpush1.msra.mxu0 %v69
  %135 = vmatprep.subr.mxu0 0.0
  %136 = vmatpush1.msra.mxu0 %v70
  %137 = vmatprep.subr.mxu0 0.0
  %138 = vmatpush1.msra.mxu0 %v71
  %139 = vmatprep.subr.mxu0 0.0
  %140 = vmatpush1.msra.mxu0 %v72
  %141 = vmatprep.subr.mxu0 0.0
  %142 = vmatpush1.msra.mxu0 %v73
  %143 = vmatprep.subr.mxu0 0.0
  %144 = vmatpush1.msra.mxu0 %v74
  %145 = vmatprep.subr.mxu0 0.0
  %146 = vmatpush1.msra.mxu0 %v75
  %147 = vmatprep.subr.mxu0 0.0
  %148 = vmatpush1.msra.mxu0 %v76
  %149 = vmatprep.subr.mxu0 0.0
  %150 = vmatpush1.msra.mxu0 %v77
  %151 = vmatprep.subr.mxu0 0.0
  %152 = vmatpush1.msra.mxu0 %v78
  %153 = vmatprep.subr.mxu0 0.0
  %154 = vmatpush1.msra.mxu0 %v79
  %155 = vmatprep.subr.mxu0 0.0
  %156 = vmatpush1.msra.mxu0 %v80
  %157 = vmatprep.subr.mxu0 0.0
  %158 = vmatpush1.msra.mxu0 %v81
  %159 = vmatprep.subr.mxu0 0.0
  %160 = vmatpush1.msra.mxu0 %v82
  %161 = vmatprep.subr.mxu0 0.0
  %162 = vmatpush1.msra.mxu0 %v83
  %163 = vmatprep.subr.mxu0 0.0
  %164 = vmatpush1.msra.mxu0 %v84
  %165 = vmatprep.mubr.f32.mxu0 %v45
  %166 = vmatmul.mubr.f32.gmra.mrb[0].mxu0 %v41
  %v167 = vpop.f32.mrb[0].mxu0
  %v168 = vadd.f32 0.0, %v167
  %v169 = vpop.f32.mrb[0].mxu0
  %170 = vmatprep.mubr.f32.mxu0 %v46
  %171 = vmatmul.mubr.f32.gmra.mrb[0].mxu0 %v42
  %v172 = vpop.f32.mrb[0].mxu0
  %v173 = vadd.f32 0.0, %v172
  %v174 = vpop.f32.mrb[0].mxu0
  %175 = vmatprep.mubr.f32.mxu0 %v47
  %176 = vmatmul.mubr.f32.gmra.mrb[0].mxu0 %v43
  %v177 = vpop.f32.mrb[0].mxu0
  %v178 = vadd.f32 0.0, %v177
  %v179 = vpop.f32.mrb[0].mxu0
  %180 = vmatprep.mubr.f32.mxu0 %v48
  %181 = vmatmul.mubr.f32.gmra.mrb[0].mxu0 %v44
  %v182 = vpop.f32.mrb[0].mxu0
  %v183 = vadd.f32 0.0, %v182
  %v184 = vpop.f32.mrb[0].mxu0
  %185 = vdwg.mxu0
  %186 = vmatprep.subr.mxu0 0.0
  %187 = vmatpush1.msra.mxu0 %v85
  %188 = vmatprep.subr.mxu0 0.0
  %189 = vmatpush1.msra.mxu0 %v86
  %190 = vmatprep.subr.mxu0 0.0
  %191 = vmatpush1.msra.mxu0 %v87
  %192 = vmatprep.subr.mxu0 0.0
  %193 = vmatpush1.msra.mxu0 %v88
  %194 = vmatprep.subr.mxu0 0.0
  %195 = vmatpush1.msra.mxu0 %v89
  %196 = vmatprep.subr.mxu0 0.0
  %197 = vmatpush1.msra.mxu0 %v90
  %198 = vmatprep.subr.mxu0 0.0
  %199 = vmatpush1.msra.mxu0 %v91
  %200 = vmatprep.subr.mxu0 0.0
  %201 = vmatpush1.msra.mxu0 %v92
  %202 = vmatprep.subr.mxu0 0.0
  %203 = vmatpush1.msra.mxu0 %v93
  %204 = vmatprep.subr.mxu0 0.0
  %205 = vmatpush1.msra.mxu0 %v94
  %206 = vmatprep.subr.mxu0 0.0
  %207 = vmatpush1.msra.mxu0 %v95
  %208 = vmatprep.subr.mxu0 0.0
  %209 = vmatpush1.msra.mxu0 %v96
  %210 = vmatprep.subr.mxu0 0.0
  %211 = vmatpush1.msra.mxu0 %v97
  %212 = vmatprep.subr.mxu0 0.0
  %213 = vmatpush1.msra.mxu0 %v98
  %214 = vmatprep.subr.mxu0 0.0
  %215 = vmatpush1.msra.mxu0 %v99
  %216 = vmatprep.subr.mxu0 0.0
  %217 = vmatpush1.msra.mxu0 %v100
  %218 = vmatprep.subr.mxu0 0.0
  %219 = vmatpush1.msra.mxu0 0.0
  %220 = vmatprep.subr.mxu0 0.0
  %221 = vmatpush1.msra.mxu0 0.0
  %222 = vmatprep.subr.mxu0 0.0
  %223 = vmatpush1.msra.mxu0 0.0
  %224 = vmatprep.subr.mxu0 0.0
  %225 = vmatpush1.msra.mxu0 0.0
  %226 = vmatprep.subr.mxu0 0.0
  %227 = vmatpush1.msra.mxu0 0.0
  %228 = vmatprep.subr.mxu0 0.0
  %229 = vmatpush1.msra.mxu0 0.0
  %230 = vmatprep.subr.mxu0 0.0
  %231 = vmatpush1.msra.mxu0 0.0
  %232 = vmatprep.subr.mxu0 0.0
  %233 = vmatpush1.msra.mxu0 0.0
  %234 = vmatprep.subr.mxu0 0.0
  %235 = vmatpush1.msra.mxu0 0.0
  %236 = vmatprep.subr.mxu0 0.0
  %237 = vmatpush1.msra.mxu0 0.0
  %238 = vmatprep.subr.mxu0 0.0
  %239 = vmatpush1.msra.mxu0 0.0
  %240 = vmatprep.subr.mxu0 0.0
  %241 = vmatpush1.msra.mxu0 0.0
  %242 = vmatprep.subr.mxu0 0.0
  %243 = vmatpush1.msra.mxu0 0.0
  %244 = vmatprep.subr.mxu0 0.0
  %245 = vmatpush1.msra.mxu0 0.0
  %246 = vmatprep.subr.mxu0 0.0
  %247 = vmatpush1.msra.mxu0 0.0
  %248 = vmatprep.subr.mxu0 0.0
  %249 = vmatpush1.msra.mxu0 0.0
  %250 = vmatprep.mubr.f32.mxu0 0.0
  %251 = vmatmul.mubr.f32.gmra.mrb[0].mxu0 %v49
  %v252 = vpop.f32.mrb[0].mxu0
  %v253 = vadd.f32 %v168, %v252
  %v254 = vpop.f32.mrb[0].mxu0
  %255 = vmatprep.mubr.f32.mxu0 0.0
  %256 = vmatmul.mubr.f32.gmra.mrb[0].mxu0 %v50
  %v257 = vpop.f32.mrb[0].mxu0
  %v258 = vadd.f32 %v173, %v257
  %v259 = vpop.f32.mrb[0].mxu0
  %260 = vmatprep.mubr.f32.mxu0 0.0
  %261 = vmatmul.mubr.f32.gmra.mrb[0].mxu0 %v51
  %v262 = vpop.f32.mrb[0].mxu0
  %v263 = vadd.f32 %v178, %v262
  %v264 = vpop.f32.mrb[0].mxu0
  %265 = vmatprep.mubr.f32.mxu0 0.0
  %266 = vmatmul.mubr.f32.gmra.mrb[0].mxu0 %v52
  %v267 = vpop.f32.mrb[0].mxu0
  %v268 = vadd.f32 %v183, %v267
  %v269 = vpop.f32.mrb[0].mxu0
  %270 = vdwg.mxu0
  %v271 = vld [vmem:[%s3] sm:$0x1]
  %v272 = vld [vmem:[%s4] sm:$0x1]
  %v273 = vadd.f32 %v253, %v258
  %v274 = vadd.f32 %v273, %v263
  %v275 = vadd.f32 %v274, %v268
  %v276 = vrot.slane %v275, 4
  %v277 = vadd.f32 %v275, %v276
  %v278 = vrot.slane %v277, 2
  %v279 = vadd.f32 %v277, %v278
  %v280 = vrot.slane %v279, 1
  %v281 = vadd.f32 %v279, %v280
  %v282 = vld [vmem:[%s7] sm:$0xff]
  %v283 = vld [vmem:[%s7 + $0x8] sm:$0xff]
  %v284 = vld [vmem:[%s7 + $0x10] sm:$0xff]
  %v285 = vld [vmem:[%s7 + $0x18] sm:$0xff]
  %v286 = vld [vmem:[%s7 + $0x20] sm:$0xff]
  %v287 = vld [vmem:[%s7 + $0x28] sm:$0xff]
  %v288 = vld [vmem:[%s7 + $0x30] sm:$0xff]
  %v289 = vld [vmem:[%s7 + $0x38] sm:$0xff]
  %v290 = vld [vmem:[%s7 + $0x40] sm:$0xff]
  %v291 = vld [vmem:[%s7 + $0x48] sm:$0xff]
  %v292 = vld [vmem:[%s7 + $0x50] sm:$0xff]
  %v293 = vld [vmem:[%s7 + $0x58] sm:$0xff]
  %v294 = vld [vmem:[%s7 + $0x60] sm:$0xff]
  %v295 = vld [vmem:[%s7 + $0x68] sm:$0xff]
  %v296 = vld [vmem:[%s7 + $0x70] sm:$0xff]
  %v297 = vld [vmem:[%s7 + $0x78] sm:$0xff]
  %298 = vmatprep.subr.mxu0 0.0
  %299 = vmatpush1.msra.mxu0 %v282
  %300 = vmatprep.subr.mxu0 0.0
  %301 = vmatpush1.msra.mxu0 %v283
  %302 = vmatprep.subr.mxu0 0.0
  %303 = vmatpush1.msra.mxu0 %v284
  %304 = vmatprep.subr.mxu0 0.0
  %305 = vmatpush1.msra.mxu0 %v285
  %306 = vmatprep.subr.mxu0 0.0
  %307 = vmatpush1.msra.mxu0 %v286
  %308 = vmatprep.subr.mxu0 0.0
  %309 = vmatpush1.msra.mxu0 %v287
  %310 = vmatprep.subr.mxu0 0.0
  %311 = vmatpush1.msra.mxu0 %v288
  %312 = vmatprep.subr.mxu0 0.0
  %313 = vmatpush1.msra.mxu0 %v289
  %314 = vmatprep.subr.mxu0 0.0
  %315 = vmatpush1.msra.mxu0 %v290
  %316 = vmatprep.subr.mxu0 0.0
  %317 = vmatpush1.msra.mxu0 %v291
  %318 = vmatprep.subr.mxu0 0.0
  %319 = vmatpush1.msra.mxu0 %v292
  %320 = vmatprep.subr.mxu0 0.0
  %321 = vmatpush1.msra.mxu0 %v293
  %322 = vmatprep.subr.mxu0 0.0
  %323 = vmatpush1.msra.mxu0 %v294
  %324 = vmatprep.subr.mxu0 0.0
  %325 = vmatpush1.msra.mxu0 %v295
  %326 = vmatprep.subr.mxu0 0.0
  %327 = vmatpush1.msra.mxu0 %v296
  %328 = vmatprep.subr.mxu0 0.0
  %329 = vmatpush1.msra.mxu0 %v297
  %330 = vmatprep.subr.mxu0 0.0
  %331 = vmatpush1.msra.mxu0 0.0
  %332 = vmatprep.subr.mxu0 0.0
  %333 = vmatpush1.msra.mxu0 0.0
  %334 = vmatprep.subr.mxu0 0.0
  %335 = vmatpush1.msra.mxu0 0.0
  %336 = vmatprep.subr.mxu0 0.0
  %337 = vmatpush1.msra.mxu0 0.0
  %338 = vmatprep.subr.mxu0 0.0
  %339 = vmatpush1.msra.mxu0 0.0
  %340 = vmatprep.subr.mxu0 0.0
  %341 = vmatpush1.msra.mxu0 0.0
  %342 = vmatprep.subr.mxu0 0.0
  %343 = vmatpush1.msra.mxu0 0.0
  %344 = vmatprep.subr.mxu0 0.0
  %345 = vmatpush1.msra.mxu0 0.0
  %346 = vmatprep.subr.mxu0 0.0
  %347 = vmatpush1.msra.mxu0 0.0
  %348 = vmatprep.subr.mxu0 0.0
  %349 = vmatpush1.msra.mxu0 0.0
  %350 = vmatprep.subr.mxu0 0.0
  %351 = vmatpush1.msra.mxu0 0.0
  %352 = vmatprep.subr.mxu0 0.0
  %353 = vmatpush1.msra.mxu0 0.0
  %354 = vmatprep.subr.mxu0 0.0
  %355 = vmatpush1.msra.mxu0 0.0
  %356 = vmatprep.subr.mxu0 0.0
  %357 = vmatpush1.msra.mxu0 0.0
  %358 = vmatprep.subr.mxu0 0.0
  %359 = vmatpush1.msra.mxu0 0.0
  %360 = vmatprep.subr.mxu0 0.0
  %361 = vmatpush1.msra.mxu0 0.0
  %362 = vmatprep.mubr.f32.mxu0 0.0
  %363 = vmatmul.mubr.f32.gmra.mrb[0].mxu0 %v281
  %v364 = vpop.f32.mrb[0].mxu0
  %v365 = vadd.f32 0.0, %v364
  %v366 = vpop.f32.mrb[0].mxu0
  %367 = vdwg.mxu0
  %v368 = vlaneseq
  %v369 = vshrl.u32 %v368, 7
  %v370 = vsub.s32 0, %v369
  %v371 = vrot.slane %v365, %v370
  %v372 = vsub.f32 %v253, %v371
  %v373 = vsub.f32 %v258, %v371
  %v374 = vsub.f32 %v263, %v371
  %v375 = vsub.f32 %v268, %v371
  %v376 = vmul.f32 %v372, %v372
  %v377 = vmul.f32 %v373, %v373
  %v378 = vmul.f32 %v374, %v374
  %v379 = vmul.f32 %v375, %v375
  %v380 = vadd.f32 %v376, %v377
  %v381 = vadd.f32 %v380, %v378
  %v382 = vadd.f32 %v381, %v379
  %v383 = vrot.slane %v382, 4
  %v384 = vadd.f32 %v382, %v383
  %v385 = vrot.slane %v384, 2
  %v386 = vadd.f32 %v384, %v385
  %v387 = vrot.slane %v386, 1
  %v388 = vadd.f32 %v386, %v387
  %389 = vmatprep.subr.mxu0 0.0
  %390 = vmatpush1.msra.mxu0 %v282
  %391 = vmatprep.subr.mxu0 0.0
  %392 = vmatpush1.msra.mxu0 %v283
  %393 = vmatprep.subr.mxu0 0.0
  %394 = vmatpush1.msra.mxu0 %v284
  %395 = vmatprep.subr.mxu0 0.0
  %396 = vmatpush1.msra.mxu0 %v285
  %397 = vmatprep.subr.mxu0 0.0
  %398 = vmatpush1.msra.mxu0 %v286
  %399 = vmatprep.subr.mxu0 0.0
  %400 = vmatpush1.msra.mxu0 %v287
  %401 = vmatprep.subr.mxu0 0.0
  %402 = vmatpush1.msra.mxu0 %v288
  %403 = vmatprep.subr.mxu0 0.0
  %404 = vmatpush1.msra.mxu0 %v289
  %405 = vmatprep.subr.mxu0 0.0
  %406 = vmatpush1.msra.mxu0 %v290
  %407 = vmatprep.subr.mxu0 0.0
  %408 = vmatpush1.msra.mxu0 %v291
  %409 = vmatprep.subr.mxu0 0.0
  %410 = vmatpush1.msra.mxu0 %v292
  %411 = vmatprep.subr.mxu0 0.0
  %412 = vmatpush1.msra.mxu0 %v293
  %413 = vmatprep.subr.mxu0 0.0
  %414 = vmatpush1.msra.mxu0 %v294
  %415 = vmatprep.subr.mxu0 0.0
  %416 = vmatpush1.msra.mxu0 %v295
  %417 = vmatprep.subr.mxu0 0.0
  %418 = vmatpush1.msra.mxu0 %v296
  %419 = vmatprep.subr.mxu0 0.0
  %420 = vmatpush1.msra.mxu0 %v297
  %421 = vmatprep.subr.mxu0 0.0
  %422 = vmatpush1.msra.mxu0 0.0
  %423 = vmatprep.subr.mxu0 0.0
  %424 = vmatpush1.msra.mxu0 0.0
  %425 = vmatprep.subr.mxu0 0.0
  %426 = vmatpush1.msra.mxu0 0.0
  %427 = vmatprep.subr.mxu0 0.0
  %428 = vmatpush1.msra.mxu0 0.0
  %429 = vmatprep.subr.mxu0 0.0
  %430 = vmatpush1.msra.mxu0 0.0
  %431 = vmatprep.subr.mxu0 0.0
  %432 = vmatpush1.msra.mxu0 0.0
  %433 = vmatprep.subr.mxu0 0.0
  %434 = vmatpush1.msra.mxu0 0.0
  %435 = vmatprep.subr.mxu0 0.0
  %436 = vmatpush1.msra.mxu0 0.0
  %437 = vmatprep.subr.mxu0 0.0
  %438 = vmatpush1.msra.mxu0 0.0
  %439 = vmatprep.subr.mxu0 0.0
  %440 = vmatpush1.msra.mxu0 0.0
  %441 = vmatprep.subr.mxu0 0.0
  %442 = vmatpush1.msra.mxu0 0.0
  %443 = vmatprep.subr.mxu0 0.0
  %444 = vmatpush1.msra.mxu0 0.0
  %445 = vmatprep.subr.mxu0 0.0
  %446 = vmatpush1.msra.mxu0 0.0
  %447 = vmatprep.subr.mxu0 0.0
  %448 = vmatpush1.msra.mxu0 0.0
  %449 = vmatprep.subr.mxu0 0.0
  %450 = vmatpush1.msra.mxu0 0.0
  %451 = vmatprep.subr.mxu0 0.0
  %452 = vmatpush1.msra.mxu0 0.0
  %453 = vmatprep.mubr.f32.mxu0 0.0
  %454 = vmatmul.mubr.f32.gmra.mrb[0].mxu0 %v388
  %v455 = vpop.f32.mrb[0].mxu0
  %v456 = vadd.f32 1e-05, %v455
  %v457 = vpop.f32.mrb[0].mxu0
  %458 = vdwg.mxu0
  %v459 = vrsqrt.pop %v456
  %v460 = vmul.f32 %v271, %v459
  %v462 = vlaneseq
  %v463 = vshrl.u32 %v462, 7
  %v464 = vsub.s32 0, %v463
  %v465 = vrot.slane %v460, %v464
  %v467 = vmul.f32 %v372, %v465
  %v468 = vmul.f32 %v373, %v465
  %v469 = vmul.f32 %v374, %v465
  %v470 = vmul.f32 %v375, %v465
  %v472 = vlaneseq
  %v473 = vshrl.u32 %v472, 7
  %v474 = vsub.s32 0, %v473
  %v475 = vrot.slane %v272, %v474
  %v477 = vadd.f32 %v467, %v475
  %v478 = vadd.f32 %v468, %v475
  %v479 = vadd.f32 %v469, %v475
  %v480 = vadd.f32 %v470, %v475
  %v481 = vmax.f32 %v477, 0.0
  %v482 = vmax.f32 %v478, 0.0
  %v483 = vmax.f32 %v479, 0.0
  %v484 = vmax.f32 %v480, 0.0
  %485 = vst [vmem:[#allocation2 + $0x1] sm:$0xff] %v481
  %486 = vst [vmem:[#allocation2 + $0x9] sm:$0xff] %v482
  %487 = vst [vmem:[#allocation2 + $0x19] sm:$0xff] %v483
  %488 = vst [vmem:[#allocation2 + $0x21] sm:$0xff] %v484
  %v489 = vld [vmem:[#allocation2] sm:$0xff]
  %v490 = vld [vmem:[#allocation2 + $0x8] sm:$0xff]
  %v491 = vld [vmem:[#allocation2 + $0x18] sm:$0xff]
  %v492 = vld [vmem:[#allocation2 + $0x20] sm:$0xff]
  %v493 = vld [vmem:[#allocation2 + $0x1] sm:$0xff]
  %v494 = vld [vmem:[#allocation2 + $0x9] sm:$0xff]
  %v495 = vld [vmem:[#allocation2 + $0x19] sm:$0xff]
  %v496 = vld [vmem:[#allocation2 + $0x21] sm:$0xff]
  %v497 = vld [vmem:[#allocation2 + $0x2] sm:$0xff]
  %v498 = vld [vmem:[#allocation2 + $0xa] sm:$0xff]
  %v499 = vld [vmem:[#allocation2 + $0x1a] sm:$0xff]
  %v500 = vld [vmem:[#allocation2 + $0x22] sm:$0xff]
  %v501 = vld [vmem:[%s2] sm:$0xff]
  %v502 = vld [vmem:[%s2 + $0x8] sm:$0xff]
  %v503 = vld [vmem:[%s2 + $0x10] sm:$0xff]
  %v504 = vld [vmem:[%s2 + $0x18] sm:$0xff]
  %v505 = vld [vmem:[%s2 + $0x20] sm:$0xff]
  %v506 = vld [vmem:[%s2 + $0x28] sm:$0xff]
  %v507 = vld [vmem:[%s2 + $0x30] sm:$0xff]
  %v508 = vld [vmem:[%s2 + $0x38] sm:$0xff]
  %v509 = vld [vmem:[%s2 + $0x40] sm:$0xff]
  %v510 = vld [vmem:[%s2 + $0x48] sm:$0xff]
  %v511 = vld [vmem:[%s2 + $0x50] sm:$0xff]
  %v512 = vld [vmem:[%s2 + $0x58] sm:$0xff]
  %v513 = vld [vmem:[%s2 + $0x60] sm:$0xff]
  %v514 = vld [vmem:[%s2 + $0x68] sm:$0xff]
  %v515 = vld [vmem:[%s2 + $0x70] sm:$0xff]
  %v516 = vld [vmem:[%s2 + $0x78] sm:$0xff]
  %v517 = vld [vmem:[%s2 + $0x80] sm:$0xff]
  %v518 = vld [vmem:[%s2 + $0x88] sm:$0xff]
  %v519 = vld [vmem:[%s2 + $0x90] sm:$0xff]
  %v520 = vld [vmem:[%s2 + $0x98] sm:$0xff]
  %v521 = vld [vmem:[%s2 + $0xa0] sm:$0xff]
  %v522 = vld [vmem:[%s2 + $0xa8] sm:$0xff]
  %v523 = vld [vmem:[%s2 + $0xb0] sm:$0xff]
  %v524 = vld [vmem:[%s2 + $0xb8] sm:$0xff]
  %v525 = vld [vmem:[%s2 + $0xc0] sm:$0xff]
  %v526 = vld [vmem:[%s2 + $0xc8] sm:$0xff]
  %v527 = vld [vmem:[%s2 + $0xd0] sm:$0xff]
  %v528 = vld [vmem:[%s2 + $0xd8] sm:$0xff]
  %v529 = vld [vmem:[%s2 + $0xe0] sm:$0xff]
  %v530 = vld [vmem:[%s2 + $0xe8] sm:$0xff]
  %v531 = vld [vmem:[%s2 + $0xf0] sm:$0xff]
  %v532 = vld [vmem:[%s2 + $0xf8] sm:$0xff]
  %v533 = vld [vmem:[%s2 + $0x100] sm:$0xff]
  %v534 = vld [vmem:[%s2 + $0x108] sm:$0xff]
  %v535 = vld [vmem:[%s2 + $0x110] sm:$0xff]
  %v536 = vld [vmem:[%s2 + $0x118] sm:$0xff]
  %v537 = vld [vmem:[%s2 + $0x120] sm:$0xff]
  %v538 = vld [vmem:[%s2 + $0x128] sm:$0xff]
  %v539 = vld [vmem:[%s2 + $0x130] sm:$0xff]
  %v540 = vld [vmem:[%s2 + $0x138] sm:$0xff]
  %v541 = vld [vmem:[%s2 + $0x140] sm:$0xff]
  %v542 = vld [vmem:[%s2 + $0x148] sm:$0xff]
  %v543 = vld [vmem:[%s2 + $0x150] sm:$0xff]
  %v544 = vld [vmem:[%s2 + $0x158] sm:$0xff]
  %v545 = vld [vmem:[%s2 + $0x160] sm:$0xff]
  %v546 = vld [vmem:[%s2 + $0x168] sm:$0xff]
  %v547 = vld [vmem:[%s2 + $0x170] sm:$0xff]
  %v548 = vld [vmem:[%s2 + $0x178] sm:$0xff]
  %549 = vmatprep.subr.mxu0 0.0
  %550 = vmatpush1.msra.mxu0 %v501
  %551 = vmatprep.subr.mxu0 0.0
  %552 = vmatpush1.msra.mxu0 %v502
  %553 = vmatprep.subr.mxu0 0.0
  %554 = vmatpush1.msra.mxu0 %v503
  %555 = vmatprep.subr.mxu0 0.0
  %556 = vmatpush1.msra.mxu0 %v504
  %557 = vmatprep.subr.mxu0 0.0
  %558 = vmatpush1.msra.mxu0 %v505
  %559 = vmatprep.subr.mxu0 0.0
  %560 = vmatpush1.msra.mxu0 %v506
  %561 = vmatprep.subr.mxu0 0.0
  %562 = vmatpush1.msra.mxu0 %v507
  %563 = vmatprep.subr.mxu0 0.0
  %564 = vmatpush1.msra.mxu0 %v508
  %565 = vmatprep.subr.mxu0 0.0
  %566 = vmatpush1.msra.mxu0 %v509
  %567 = vmatprep.subr.mxu0 0.0
  %568 = vmatpush1.msra.mxu0 %v510
  %569 = vmatprep.subr.mxu0 0.0
  %570 = vmatpush1.msra.mxu0 %v511
  %571 = vmatprep.subr.mxu0 0.0
  %572 = vmatpush1.msra.mxu0 %v512
  %573 = vmatprep.subr.mxu0 0.0
  %574 = vmatpush1.msra.mxu0 %v513
  %575 = vmatprep.subr.mxu0 0.0
  %576 = vmatpush1.msra.mxu0 %v514
  %577 = vmatprep.subr.mxu0 0.0
  %578 = vmatpush1.msra.mxu0 %v515
  %579 = vmatprep.subr.mxu0 0.0
  %580 = vmatpush1.msra.mxu0 %v516
  %581 = vmatprep.subr.mxu0 0.0
  %582 = vmatpush1.msra.mxu0 %v517
  %583 = vmatprep.subr.mxu0 0.0
  %584 = vmatpush1.msra.mxu0 %v518
  %585 = vmatprep.subr.mxu0 0.0
  %586 = vmatpush1.msra.mxu0 %v519
  %587 = vmatprep.subr.mxu0 0.0
  %588 = vmatpush1.msra.mxu0 %v520
  %589 = vmatprep.subr.mxu0 0.0
  %590 = vmatpush1.msra.mxu0 %v521
  %591 = vmatprep.subr.mxu0 0.0
  %592 = vmatpush1.msra.mxu0 %v522
  %593 = vmatprep.subr.mxu0 0.0
  %594 = vmatpush1.msra.mxu0 %v523
  %595 = vmatprep.subr.mxu0 0.0
  %596 = vmatpush1.msra.mxu0 %v524
  %597 = vmatprep.subr.mxu0 0.0
  %598 = vmatpush1.msra.mxu0 %v525
  %599 = vmatprep.subr.mxu0 0.0
  %600 = vmatpush1.msra.mxu0 %v526
  %601 = vmatprep.subr.mxu0 0.0
  %602 = vmatpush1.msra.mxu0 %v527
  %603 = vmatprep.subr.mxu0 0.0
  %604 = vmatpush1.msra.mxu0 %v528
  %605 = vmatprep.subr.mxu0 0.0
  %606 = vmatpush1.msra.mxu0 %v529
  %607 = vmatprep.subr.mxu0 0.0
  %608 = vmatpush1.msra.mxu0 %v530
  %609 = vmatprep.subr.mxu0 0.0
  %610 = vmatpush1.msra.mxu0 %v531
  %611 = vmatprep.subr.mxu0 0.0
  %612 = vmatpush1.msra.mxu0 %v532
  %613 = vmatprep.mubr.f32.mxu0 %v493
  %614 = vmatmul.mubr.f32.gmra.mrb[0].mxu0 %v489
  %v615 = vpop.f32.mrb[0].mxu0
  %v616 = vadd.f32 0.0, %v615
  %v617 = vpop.f32.mrb[0].mxu0
  %618 = vmatprep.mubr.f32.mxu0 %v494
  %619 = vmatmul.mubr.f32.gmra.mrb[0].mxu0 %v490
  %v620 = vpop.f32.mrb[0].mxu0
  %v621 = vadd.f32 0.0, %v620
  %v622 = vpop.f32.mrb[0].mxu0
  %623 = vmatprep.mubr.f32.mxu0 %v495
  %624 = vmatmul.mubr.f32.gmra.mrb[0].mxu0 %v491
  %v625 = vpop.f32.mrb[0].mxu0
  %v626 = vadd.f32 0.0, %v625
  %v627 = vpop.f32.mrb[0].mxu0
  %628 = vmatprep.mubr.f32.mxu0 %v496
  %629 = vmatmul.mubr.f32.gmra.mrb[0].mxu0 %v492
  %v630 = vpop.f32.mrb[0].mxu0
  %v631 = vadd.f32 0.0, %v630
  %v632 = vpop.f32.mrb[0].mxu0
  %633 = vdwg.mxu0
  %634 = vmatprep.subr.mxu0 0.0
  %635 = vmatpush1.msra.mxu0 %v533
  %636 = vmatprep.subr.mxu0 0.0
  %637 = vmatpush1.msra.mxu0 %v534
  %638 = vmatprep.subr.mxu0 0.0
  %639 = vmatpush1.msra.mxu0 %v535
  %640 = vmatprep.subr.mxu0 0.0
  %641 = vmatpush1.msra.mxu0 %v536
  %642 = vmatprep.subr.mxu0 0.0
  %643 = vmatpush1.msra.mxu0 %v537
  %644 = vmatprep.subr.mxu0 0.0
  %645 = vmatpush1.msra.mxu0 %v538
  %646 = vmatprep.subr.mxu0 0.0
  %647 = vmatpush1.msra.mxu0 %v539
  %648 = vmatprep.subr.mxu0 0.0
  %649 = vmatpush1.msra.mxu0 %v540
  %650 = vmatprep.subr.mxu0 0.0
  %651 = vmatpush1.msra.mxu0 %v541
  %652 = vmatprep.subr.mxu0 0.0
  %653 = vmatpush1.msra.mxu0 %v542
  %654 = vmatprep.subr.mxu0 0.0
  %655 = vmatpush1.msra.mxu0 %v543
  %656 = vmatprep.subr.mxu0 0.0
  %657 = vmatpush1.msra.mxu0 %v544
  %658 = vmatprep.subr.mxu0 0.0
  %659 = vmatpush1.msra.mxu0 %v545
  %660 = vmatprep.subr.mxu0 0.0
  %661 = vmatpush1.msra.mxu0 %v546
  %662 = vmatprep.subr.mxu0 0.0
  %663 = vmatpush1.msra.mxu0 %v547
  %664 = vmatprep.subr.mxu0 0.0
  %665 = vmatpush1.msra.mxu0 %v548
  %666 = vmatprep.subr.mxu0 0.0
  %667 = vmatpush1.msra.mxu0 0.0
  %668 = vmatprep.subr.mxu0 0.0
  %669 = vmatpush1.msra.mxu0 0.0
  %670 = vmatprep.subr.mxu0 0.0
  %671 = vmatpush1.msra.mxu0 0.0
  %672 = vmatprep.subr.mxu0 0.0
  %673 = vmatpush1.msra.mxu0 0.0
  %674 = vmatprep.subr.mxu0 0.0
  %675 = vmatpush1.msra.mxu0 0.0
  %676 = vmatprep.subr.mxu0 0.0
  %677 = vmatpush1.msra.mxu0 0.0
  %678 = vmatprep.subr.mxu0 0.0
  %679 = vmatpush1.msra.mxu0 0.0
  %680 = vmatprep.subr.mxu0 0.0
  %681 = vmatpush1.msra.mxu0 0.0
  %682 = vmatprep.subr.mxu0 0.0
  %683 = vmatpush1.msra.mxu0 0.0
  %684 = vmatprep.subr.mxu0 0.0
  %685 = vmatpush1.msra.mxu0 0.0
  %686 = vmatprep.subr.mxu0 0.0
  %687 = vmatpush1.msra.mxu0 0.0
  %688 = vmatprep.subr.mxu0 0.0
  %689 = vmatpush1.msra.mxu0 0.0
  %690 = vmatprep.subr.mxu0 0.0
  %691 = vmatpush1.msra.mxu0 0.0
  %692 = vmatprep.subr.mxu0 0.0
  %693 = vmatpush1.msra.mxu0 0.0
  %694 = vmatprep.subr.mxu0 0.0
  %695 = vmatpush1.msra.mxu0 0.0
  %696 = vmatprep.subr.mxu0 0.0
  %697 = vmatpush1.msra.mxu0 0.0
  %698 = vmatprep.mubr.f32.mxu0 0.0
  %699 = vmatmul.mubr.f32.gmra.mrb[0].mxu0 %v497
  %v700 = vpop.f32.mrb[0].mxu0
  %v701 = vadd.f32 %v616, %v700
  %v702 = vpop.f32.mrb[0].mxu0
  %703 = vmatprep.mubr.f32.mxu0 0.0
  %704 = vmatmul.mubr.f32.gmra.mrb[0].mxu0 %v498
  %v705 = vpop.f32.mrb[0].mxu0
  %v706 = vadd.f32 %v621, %v705
  %v707 = vpop.f32.mrb[0].mxu0
  %708 = vmatprep.mubr.f32.mxu0 0.0
  %709 = vmatmul.mubr.f32.gmra.mrb[0].mxu0 %v499
  %v710 = vpop.f32.mrb[0].mxu0
  %v711 = vadd.f32 %v626, %v710
  %v712 = vpop.f32.mrb[0].mxu0
  %713 = vmatprep.mubr.f32.mxu0 0.0
  %714 = vmatmul.mubr.f32.gmra.mrb[0].mxu0 %v500
  %v715 = vpop.f32.mrb[0].mxu0
  %v716 = vadd.f32 %v631, %v715
  %v717 = vpop.f32.mrb[0].mxu0
  %718 = vdwg.mxu0
  %v719 = vld [vmem:[%s5] sm:$0x1]
  %v720 = vld [vmem:[%s6] sm:$0x1]
  %v721 = vadd.f32 %v701, %v706
  %v722 = vadd.f32 %v721, %v711
  %v723 = vadd.f32 %v722, %v716
  %v724 = vrot.slane %v723, 4
  %v725 = vadd.f32 %v723, %v724
  %v726 = vrot.slane %v725, 2
  %v727 = vadd.f32 %v725, %v726
  %v728 = vrot.slane %v727, 1
  %v729 = vadd.f32 %v727, %v728
  %v730 = vld [vmem:[%s7] sm:$0xff]
  %v731 = vld [vmem:[%s7 + $0x8] sm:$0xff]
  %v732 = vld [vmem:[%s7 + $0x10] sm:$0xff]
  %v733 = vld [vmem:[%s7 + $0x18] sm:$0xff]
  %v734 = vld [vmem:[%s7 + $0x20] sm:$0xff]
  %v735 = vld [vmem:[%s7 + $0x28] sm:$0xff]
  %v736 = vld [vmem:[%s7 + $0x30] sm:$0xff]
  %v737 = vld [vmem:[%s7 + $0x38] sm:$0xff]
  %v738 = vld [vmem:[%s7 + $0x40] sm:$0xff]
  %v739 = vld [vmem:[%s7 + $0x48] sm:$0xff]
  %v740 = vld [vmem:[%s7 + $0x50] sm:$0xff]
  %v741 = vld [vmem:[%s7 + $0x58] sm:$0xff]
  %v742 = vld [vmem:[%s7 + $0x60] sm:$0xff]
  %v743 = vld [vmem:[%s7 + $0x68] sm:$0xff]
  %v744 = vld [vmem:[%s7 + $0x70] sm:$0xff]
  %v745 = vld [vmem:[%s7 + $0x78] sm:$0xff]
  %746 = vmatprep.subr.mxu0 0.0
  %747 = vmatpush1.msra.mxu0 %v730
  %748 = vmatprep.subr.mxu0 0.0
  %749 = vmatpush1.msra.mxu0 %v731
  %750 = vmatprep.subr.mxu0 0.0
  %751 = vmatpush1.msra.mxu0 %v732
  %752 = vmatprep.subr.mxu0 0.0
  %753 = vmatpush1.msra.mxu0 %v733
  %754 = vmatprep.subr.mxu0 0.0
  %755 = vmatpush1.msra.mxu0 %v734
  %756 = vmatprep.subr.mxu0 0.0
  %757 = vmatpush1.msra.mxu0 %v735
  %758 = vmatprep.subr.mxu0 0.0
  %759 = vmatpush1.msra.mxu0 %v736
  %760 = vmatprep.subr.mxu0 0.0
  %761 = vmatpush1.msra.mxu0 %v737
  %762 = vmatprep.subr.mxu0 0.0
  %763 = vmatpush1.msra.mxu0 %v738
  %764 = vmatprep.subr.mxu0 0.0
  %765 = vmatpush1.msra.mxu0 %v739
  %766 = vmatprep.subr.mxu0 0.0
  %767 = vmatpush1.msra.mxu0 %v740
  %768 = vmatprep.subr.mxu0 0.0
  %769 = vmatpush1.msra.mxu0 %v741
  %770 = vmatprep.subr.mxu0 0.0
  %771 = vmatpush1.msra.mxu0 %v742
  %772 = vmatprep.subr.mxu0 0.0
  %773 = vmatpush1.msra.mxu0 %v743
  %774 = vmatprep.subr.mxu0 0.0
  %775 = vmatpush1.msra.mxu0 %v744
  %776 = vmatprep.subr.mxu0 0.0
  %777 = vmatpush1.msra.mxu0 %v745
  %778 = vmatprep.subr.mxu0 0.0
  %779 = vmatpush1.msra.mxu0 0.0
  %780 = vmatprep.subr.mxu0 0.0
  %781 = vmatpush1.msra.mxu0 0.0
  %782 = vmatprep.subr.mxu0 0.0
  %783 = vmatpush1.msra.mxu0 0.0
  %784 = vmatprep.subr.mxu0 0.0
  %785 = vmatpush1.msra.mxu0 0.0
  %786 = vmatprep.subr.mxu0 0.0
  %787 = vmatpush1.msra.mxu0 0.0
  %788 = vmatprep.subr.mxu0 0.0
  %789 = vmatpush1.msra.mxu0 0.0
  %790 = vmatprep.subr.mxu0 0.0
  %791 = vmatpush1.msra.mxu0 0.0
  %792 = vmatprep.subr.mxu0 0.0
  %793 = vmatpush1.msra.mxu0 0.0
  %794 = vmatprep.subr.mxu0 0.0
  %795 = vmatpush1.msra.mxu0 0.0
  %796 = vmatprep.subr.mxu0 0.0
  %797 = vmatpush1.msra.mxu0 0.0
  %798 = vmatprep.subr.mxu0 0.0
  %799 = vmatpush1.msra.mxu0 0.0
  %800 = vmatprep.subr.mxu0 0.0
  %801 = vmatpush1.msra.mxu0 0.0
  %802 = vmatprep.subr.mxu0 0.0
  %803 = vmatpush1.msra.mxu0 0.0
  %804 = vmatprep.subr.mxu0 0.0
  %805 = vmatpush1.msra.mxu0 0.0
  %806 = vmatprep.subr.mxu0 0.0
  %807 = vmatpush1.msra.mxu0 0.0
  %808 = vmatprep.subr.mxu0 0.0
  %809 = vmatpush1.msra.mxu0 0.0
  %810 = vmatprep.mubr.f32.mxu0 0.0
  %811 = vmatmul.mubr.f32.gmra.mrb[0].mxu0 %v729
  %v812 = vpop.f32.mrb[0].mxu0
  %v813 = vadd.f32 0.0, %v812
  %v814 = vpop.f32.mrb[0].mxu0
  %815 = vdwg.mxu0
  %v816 = vlaneseq
  %v817 = vshrl.u32 %v816, 7
  %v818 = vsub.s32 0, %v817
  %v819 = vrot.slane %v813, %v818
  %v820 = vsub.f32 %v701, %v819
  %v821 = vsub.f32 %v706, %v819
  %v822 = vsub.f32 %v711, %v819
  %v823 = vsub.f32 %v716, %v819
  %v824 = vmul.f32 %v820, %v820
  %v825 = vmul.f32 %v821, %v821
  %v826 = vmul.f32 %v822, %v822
  %v827 = vmul.f32 %v823, %v823
  %v828 = vadd.f32 %v824, %v825
  %v829 = vadd.f32 %v828, %v826
  %v830 = vadd.f32 %v829, %v827
  %v831 = vrot.slane %v830, 4
  %v832 = vadd.f32 %v830, %v831
  %v833 = vrot.slane %v832, 2
  %v834 = vadd.f32 %v832, %v833
  %v835 = vrot.slane %v834, 1
  %v836 = vadd.f32 %v834, %v835
  %837 = vmatprep.subr.mxu0 0.0
  %838 = vmatpush1.msra.mxu0 %v730
  %839 = vmatprep.subr.mxu0 0.0
  %840 = vmatpush1.msra.mxu0 %v731
  %841 = vmatprep.subr.mxu0 0.0
  %842 = vmatpush1.msra.mxu0 %v732
  %843 = vmatprep.subr.mxu0 0.0
  %844 = vmatpush1.msra.mxu0 %v733
  %845 = vmatprep.subr.mxu0 0.0
  %846 = vmatpush1.msra.mxu0 %v734
  %847 = vmatprep.subr.mxu0 0.0
  %848 = vmatpush1.msra.mxu0 %v735
  %849 = vmatprep.subr.mxu0 0.0
  %850 = vmatpush1.msra.mxu0 %v736
  %851 = vmatprep.subr.mxu0 0.0
  %852 = vmatpush1.msra.mxu0 %v737
  %853 = vmatprep.subr.mxu0 0.0
  %854 = vmatpush1.msra.mxu0 %v738
  %855 = vmatprep.subr.mxu0 0.0
  %856 = vmatpush1.msra.mxu0 %v739
  %857 = vmatprep.subr.mxu0 0.0
  %858 = vmatpush1.msra.mxu0 %v740
  %859 = vmatprep.subr.mxu0 0.0
  %860 = vmatpush1.msra.mxu0 %v741
  %861 = vmatprep.subr.mxu0 0.0
  %862 = vmatpush1.msra.mxu0 %v742
  %863 = vmatprep.subr.mxu0 0.0
  %864 = vmatpush1.msra.mxu0 %v743
  %865 = vmatprep.subr.mxu0 0.0
  %866 = vmatpush1.msra.mxu0 %v744
  %867 = vmatprep.subr.mxu0 0.0
  %868 = vmatpush1.msra.mxu0 %v745
  %869 = vmatprep.subr.mxu0 0.0
  %870 = vmatpush1.msra.mxu0 0.0
  %871 = vmatprep.subr.mxu0 0.0
  %872 = vmatpush1.msra.mxu0 0.0
  %873 = vmatprep.subr.mxu0 0.0
  %874 = vmatpush1.msra.mxu0 0.0
  %875 = vmatprep.subr.mxu0 0.0
  %876 = vmatpush1.msra.mxu0 0.0
  %877 = vmatprep.subr.mxu0 0.0
  %878 = vmatpush1.msra.mxu0 0.0
  %879 = vmatprep.subr.mxu0 0.0
  %880 = vmatpush1.msra.mxu0 0.0
  %881 = vmatprep.subr.mxu0 0.0
  %882 = vmatpush1.msra.mxu0 0.0
  %883 = vmatprep.subr.mxu0 0.0
  %884 = vmatpush1.msra.mxu0 0.0
  %885 = vmatprep.subr.mxu0 0.0
  %886 = vmatpush1.msra.mxu0 0.0
  %887 = vmatprep.subr.mxu0 0.0
  %888 = vmatpush1.msra.mxu0 0.0
  %889 = vmatprep.subr.mxu0 0.0
  %890 = vmatpush1.msra.mxu0 0.0
  %891 = vmatprep.subr.mxu0 0.0
  %892 = vmatpush1.msra.mxu0 0.0
  %893 = vmatprep.subr.mxu0 0.0
  %894 = vmatpush1.msra.mxu0 0.0
  %895 = vmatprep.subr.mxu0 0.0
  %896 = vmatpush1.msra.mxu0 0.0
  %897 = vmatprep.subr.mxu0 0.0
  %898 = vmatpush1.msra.mxu0 0.0
  %899 = vmatprep.subr.mxu0 0.0
  %900 = vmatpush1.msra.mxu0 0.0
  %901 = vmatprep.mubr.f32.mxu0 0.0
  %902 = vmatmul.mubr.f32.gmra.mrb[0].mxu0 %v836
  %v903 = vpop.f32.mrb[0].mxu0
  %v904 = vadd.f32 1e-05, %v903
  %v905 = vpop.f32.mrb[0].mxu0
  %906 = vdwg.mxu0
  %v907 = vrsqrt.pop %v904
  %v908 = vmul.f32 %v719, %v907
  %v910 = vlaneseq
  %v911 = vshrl.u32 %v910, 7
  %v912 = vsub.s32 0, %v911
  %v913 = vrot.slane %v908, %v912
  %v915 = vmul.f32 %v820, %v913
  %v916 = vmul.f32 %v821, %v913
  %v917 = vmul.f32 %v822, %v913
  %v918 = vmul.f32 %v823, %v913
  %v920 = vlaneseq
  %v921 = vshrl.u32 %v920, 7
  %v922 = vsub.s32 0, %v921
  %v923 = vrot.slane %v720, %v922
  %v925 = vadd.f32 %v915, %v923
  %v926 = vadd.f32 %v916, %v923
  %v927 = vadd.f32 %v917, %v923
  %v928 = vadd.f32 %v918, %v923
  %v929 = vld [vmem:[%s0] sm:$0xff]
  %v930 = vld [vmem:[%s0 + $0x8] sm:$0xff]
  %v931 = vld [vmem:[%s0 + $0x10] sm:$0xff]
  %v932 = vld [vmem:[%s0 + $0x18] sm:$0xff]
  %v933 = vadd.f32 %v925, %v929
  %v934 = vadd.f32 %v926, %v930
  %v935 = vadd.f32 %v927, %v931
  %v936 = vadd.f32 %v928, %v932
  %v937 = vmax.f32 %v933, 0.0
  %v938 = vmax.f32 %v934, 0.0
  %v939 = vmax.f32 %v935, 0.0
  %v940 = vmax.f32 %v936, 0.0
  %941 = vst [vmem:[%s8] sm:$0xff] %v937
  %942 = vst [vmem:[%s8 + $0x8] sm:$0xff] %v938
  %943 = vst [vmem:[%s8 + $0x10] sm:$0xff] %v939
  %944 = vst [vmem:[%s8 + $0x18] sm:$0xff] %v940
  // Predicated region
  $region34: #{block_forward.1} parent=0 // pred_check
    _
  $region35: #{block_forward.1} parent=0 // pred_check_branch
    %946 = sbr.rel (0) target = $region37
  $region36: #{block_forward.1} parent=0 // pred_region
    _
  $region37: #{block_forward.1} parent=0 // pred_fallthru
    _
  // Predicated region
  $region38: #{block_forward.1} parent=0 // pred_check
    _
  $region39: #{block_forward.1} parent=0 // pred_check_branch
    %948 = sbr.rel (0) target = $region41
  $region40: #{block_forward.1} parent=0 // pred_region
    _
  $region41: #{block_forward.1} parent=0 // pred_fallthru
    _

</llo_original>
